<compile_context>
chip_gen: v7x
topology: tpu7x:2x2x1
jax: 0.10.0
libtpu: 0.0.40
codegen_flags: <defaults>
</compile_context>

<pallas_src>
import functools

import jax
import jax.numpy as jnp
from jax.experimental import pallas as pl
from jax.experimental.pallas import tpu as pltpu


# ----------------------------- helpers --------------------------------------

def _round_up(x, m):
    return ((x + m - 1) // m) * m


def _row_l2(v):
    """F.normalize(v, dim=1): v / max(||v||_2, 1e-12), via rsqrt * mul."""
    ss = jnp.sum(v * v, axis=1, keepdims=True)
    inv = jax.lax.rsqrt(jnp.maximum(ss, 1e-24))   # == 1 / max(||v||, 1e-12)
    return v * inv


# ----------------------------- Pallas kernel ---------------------------------

def _pda_branch_kernel(a_ref, x_ref, o_ref, *, num_layers):
    """One grid step == one adjacency branch (title / year / category).

    a_ref : VMEM (N, N) bf16   this branch's normalized adjacency
    x_ref : VMEM (N, D) bf16   row-normalized embeddings (resident, constant)
    o_ref : VMEM (N, D) f32    this branch's propagated + L2-normalized output
    """
    a = a_ref[...]
    h = x_ref[...]
    for layer in range(num_layers):                 # LGConv: h <- A_hat @ h
        h = jnp.dot(a, h, preferred_element_type=jnp.float32)
        if layer + 1 < num_layers:
            h = h.astype(jnp.bfloat16)              # bf16 MXU inputs, f32 acc
    o_ref[...] = _row_l2(h.astype(jnp.float32))


def pda_gnn_pallas(adjs_bf16, xn_bf16, *, num_layers):
    """adjs (3, N, N) bf16, xn (N, D) bf16 -> (3, N, D) f32 branch outputs."""
    nb, n, _ = adjs_bf16.shape
    _, d = xn_bf16.shape

    # VMEM budget: double-buffered bf16 A + bf16 X + f32 per-branch output.
    vmem_limit = (2 * n * n * 2) + (2 * n * d * 2) + (2 * n * d * 4) + (4 << 20)
    vmem_limit = min(vmem_limit, 100 * 1024 * 1024)

    kernel = functools.partial(_pda_branch_kernel, num_layers=num_layers)
    return pl.pallas_call(
        kernel,
        out_shape=jax.ShapeDtypeStruct((nb, n, d), jnp.float32),
        grid_spec=pltpu.PrefetchScalarGridSpec(
            num_scalar_prefetch=0,
            grid=(nb,),
            in_specs=[
                pl.BlockSpec((None, n, n), lambda b: (b, 0, 0)),   # A_hat[b]
                pl.BlockSpec((n, d), lambda b: (0, 0)),            # X (resident)
            ],
            out_specs=pl.BlockSpec((None, n, d), lambda b: (b, 0, 0)),
        ),
        compiler_params=pltpu.CompilerParams(
            dimension_semantics=("parallel",),       # branches are independent
            vmem_limit_bytes=int(vmem_limit)),
    )(adjs_bf16, xn_bf16)


# ------------------------------ JAX glue -------------------------------------

def build_norm_adj(edge_index, n_pad):
    """Dense symmetric-normalized adjacency A_hat = D^{-1/2} A D^{-1/2}.

    Matches PyG gcn_norm(add_self_loops=False) for a symmetric edge set
    (duplicate edges counted with multiplicity, like non-coalesced PyG).
    A[dst, src] counts edges src -> dst; deg from target-side scatter.
    """
    src, dst = edge_index[0], edge_index[1]
    a = jnp.zeros((n_pad, n_pad), jnp.float32).at[dst, src].add(1.0)
    deg = jnp.zeros((n_pad,), jnp.float32).at[dst].add(1.0)
    dinv = jnp.where(deg > 0, jax.lax.rsqrt(jnp.maximum(deg, 1.0)), 0.0)
    return a * dinv[:, None] * dinv[None, :]


def prepare_adjacencies(edge_index_title, edge_index_year, edge_index_cat,
                        num_nodes):
    """Build the three normalized adjacencies ONCE (static given edge_index).

    Cache the returned array across forward calls so the Pallas kernel is the
    only per-step A_hat reader.
    """
    n_pad = _round_up(num_nodes, 16)   # bf16 sublane-friendly, >= (8,*) tiling
    adjs = jnp.stack(
        [build_norm_adj(ei, n_pad)
         for ei in (edge_index_title, edge_index_year, edge_index_cat)],
        axis=0)
    return adjs.astype(jnp.bfloat16)


def pda_gnn_forward(embedding_weight, alpha, adjs_bf16, num_layers=2):
    """Forward of PDA_GNN given pre-built normalized adjacencies."""
    num_nodes, d = embedding_weight.shape
    n_pad = adjs_bf16.shape[1]
    d_pad = _round_up(d, 128)

    # x = F.normalize(embedding.weight, dim=1) in the wrapper; padded rows are
    # exactly zero and are sliced off at the end.
    xn = _row_l2(embedding_weight.astype(jnp.float32))
    xn = jnp.pad(xn, ((0, n_pad - num_nodes), (0, d_pad - d)))
    xn = xn.astype(jnp.bfloat16)

    branch = pda_gnn_pallas(adjs_bf16, xn, num_layers=num_layers)  # (3, Np, Dp)

    # weights = clamp(softmax(alpha), min=1e-4); weights /= weights.sum()
    w = jax.nn.softmax(alpha)
    w = jnp.clip(w, 1e-4, None)
    w = (w / jnp.sum(w)).astype(jnp.float32)

    out = jnp.tensordot(w, branch, axes=1)           # alpha-weighted combine
    return out[:num_nodes, :d]


# -------------------------------- main ----------------------------------------

def _make_symmetric_edges(key, num_nodes, num_edges):
    src = jax.random.randint(key, (num_edges,), 0, num_nodes)
    dst = jax.random.randint(jax.random.fold_in(key, 1),
                             (num_edges,), 0, num_nodes)
    # symmetrize so in-degree == out-degree (undirected graph, like MovieLens)
    s = jnp.concatenate([src, dst])
    d = jnp.concatenate([dst, src])
    return jnp.stack([s, d], axis=0)


def _reference_forward(emb, alpha, eis, num_layers=2):
    """Plain-JAX f32 reference mirroring the PyTorch module semantics."""
    def l2n(v):
        return v / jnp.maximum(
            jnp.sqrt(jnp.sum(v * v, axis=1, keepdims=True)), 1e-12)
    x = l2n(emb)
    outs = []
    for ei in eis:
        a_hat = build_norm_adj(ei, emb.shape[0])
        h = x
        for _ in range(num_layers):
            h = a_hat @ h
        outs.append(l2n(h))
    w = jax.nn.softmax(alpha)
    w = jnp.clip(w, 1e-4, None)
    w = w / jnp.sum(w)
    return w[0] * outs[0] + w[1] * outs[1] + w[2] * outs[2]


if __name__ == "__main__":
    num_nodes = 256
    embedding_dim = 64
    num_layers = 2
    num_edges = 512

    key = jax.random.PRNGKey(0)
    k_emb, k_t, k_y, k_c = jax.random.split(key, 4)

    # nn.Embedding(num_nodes, embedding_dim) + kaiming_uniform_(nonlinearity='linear')
    # fan_in = embedding_dim, gain = 1 -> bound = sqrt(3 / fan_in)
    bound = (3.0 / embedding_dim) ** 0.5
    embedding_weight = jax.random.uniform(
        k_emb, (num_nodes, embedding_dim), jnp.float32, -bound, bound)

    # alpha parameter (default [1.0, 1.0, 1.0])
    alpha = jnp.array([1.0, 1.0, 1.0], dtype=jnp.float32)

    edge_index_title = _make_symmetric_edges(k_t, num_nodes, num_edges)
    edge_index_year = _make_symmetric_edges(k_y, num_nodes, num_edges)
    edge_index_cat = _make_symmetric_edges(k_c, num_nodes, num_edges)

    # Built once (static given edge_index); reused by every forward call.
    adjs_bf16 = jax.block_until_ready(
        prepare_adjacencies(edge_index_title, edge_index_year, edge_index_cat,
                            num_nodes))

    fwd = jax.jit(functools.partial(pda_gnn_forward, num_layers=num_layers))
    out = fwd(embedding_weight, alpha, adjs_bf16)
    out = jax.block_until_ready(out)

    ref = _reference_forward(
        embedding_weight, alpha,
        (edge_index_title, edge_index_year, edge_index_cat),
        num_layers=num_layers)

    assert out.shape == (num_nodes, embedding_dim)
    max_err = float(jnp.max(jnp.abs(out - ref)))
    # bf16 A_hat / activations => loosened tolerance vs. the f32 reference.
    assert jnp.allclose(out, ref, atol=3e-2, rtol=3e-2), (
        f"mismatch vs reference, max abs err = {max_err}")

    print("KERNEL_OK")
</pallas_src>

<mosaic_0001>
module attributes {stable_mosaic.version = 11 : i64} {
  func.func @_pda_branch_kernel(%arg0: i32, %arg1: memref<1x256x256xbf16, #tpu.memory_space<vmem>>, %arg2: memref<256x128xbf16, #tpu.memory_space<vmem>>, %arg3: memref<1x256x128xf32, #tpu.memory_space<vmem>>) attributes {dimension_semantics = [#tpu.dimension_semantics<parallel>], iteration_bounds = array<i64: 3>, scalar_prefetch = 0 : i64, scratch_operands = 0 : i64, tpu.core_type = #tpu.core_type<tc>, window_params = [{transform_indices = @transform_0, window_bounds = array<i64: 1, 256, 256>}, {pipeline_mode = #tpu.pipeline_mode<synchronous>, transform_indices = @transform_1, window_bounds = array<i64: 256, 128>}, {transform_indices = @transform_2, window_bounds = array<i64: 1, 256, 128>}]} {
    %c0 = arith.constant 0 : index
    %c0_0 = arith.constant 0 : index
    %c0_1 = arith.constant 0 : index
    %0 = vector.load %arg1[%c0, %c0_0, %c0_1] : memref<1x256x256xbf16, #tpu.memory_space<vmem>>, vector<1x256x256xbf16>
    %1 = vector.shape_cast %0 : vector<1x256x256xbf16> to vector<256x256xbf16>
    %c0_2 = arith.constant 0 : index
    %c0_3 = arith.constant 0 : index
    %2 = vector.load %arg2[%c0_2, %c0_3] : memref<256x128xbf16, #tpu.memory_space<vmem>>, vector<256x128xbf16>
    %cst = arith.constant dense<0.000000e+00> : vector<256x128xf32>
    %3 = tpu.matmul %1, %2, %cst {dimension_numbers = #tpu.dot_dimension_numbers<[1], [0], [0], [1], [0, 0, 1, 1], [], []>} : vector<256x256xbf16>, vector<256x128xbf16>, vector<256x128xf32> -> vector<256x128xf32>
    %4 = arith.truncf %3 : vector<256x128xf32> to vector<256x128xbf16>
    %cst_4 = arith.constant dense<0.000000e+00> : vector<256x128xf32>
    %5 = tpu.matmul %1, %4, %cst_4 {dimension_numbers = #tpu.dot_dimension_numbers<[1], [0], [0], [1], [0, 0, 1, 1], [], []>} : vector<256x256xbf16>, vector<256x128xbf16>, vector<256x128xf32> -> vector<256x128xf32>
    %6 = arith.mulf %5, %5 : vector<256x128xf32>
    %cst_5 = arith.constant dense<0.000000e+00> : vector<256xf32>
    %7 = vector.multi_reduction <add>, %6, %cst_5 [1] : vector<256x128xf32> to vector<256xf32>
    %8 = vector.shape_cast %7 : vector<256xf32> to vector<256x1xf32>
    %cst_6 = arith.constant 1.000000e-24 : f32
    %9 = vector.broadcast %cst_6 : f32 to vector<256x1xf32>
    %10 = arith.maximumf %8, %9 : vector<256x1xf32>
    %11 = math.rsqrt %10 : vector<256x1xf32>
    %12 = vector.broadcast %11 : vector<256x1xf32> to vector<256x128xf32>
    %13 = arith.mulf %5, %12 : vector<256x128xf32>
    %c0_7 = arith.constant 0 : index
    %c0_8 = arith.constant 0 : index
    %c0_9 = arith.constant 0 : index
    %14 = vector.load %arg3[%c0_7, %c0_8, %c0_9] : memref<1x256x128xf32, #tpu.memory_space<vmem>>, vector<1x256x128xf32>
    %15 = vector.shape_cast %14 : vector<1x256x128xf32> to vector<256x128xf32>
    %16 = vector.shape_cast %13 : vector<256x128xf32> to vector<1x256x128xf32>
    tpu.vector_store %arg3[%c0_7, %c0_8, %c0_9], %16 {strides = array<i32>} : memref<1x256x128xf32, #tpu.memory_space<vmem>>, vector<1x256x128xf32>,
    return
  }
  func.func @transform_0(%arg0: i32) -> (i32, i32, i32) {
    %c0_i32 = arith.constant 0 : i32
    %c0_i32_0 = arith.constant 0 : i32
    %c0_i32_1 = arith.constant 0 : i32
    return %arg0, %c0_i32, %c0_i32_0 : i32, i32, i32
  }
  func.func @transform_1(%arg0: i32) -> (i32, i32) {
    %c0_i32 = arith.constant 0 : i32
    %c0_i32_0 = arith.constant 0 : i32
    %c0_i32_1 = arith.constant 0 : i32
    return %c0_i32, %c0_i32_0 : i32, i32
  }
  func.func @transform_2(%arg0: i32) -> (i32, i32, i32) {
    %c0_i32 = arith.constant 0 : i32
    %c0_i32_0 = arith.constant 0 : i32
    %c0_i32_1 = arith.constant 0 : i32
    return %arg0, %c0_i32, %c0_i32_0 : i32, i32, i32
  }
}

</mosaic_0001>

<llo_original>
// kernel: pda_gnn_forward.1
$region0: #{pda_gnn_forward.1}
  #allocation0 [shape = 'u32[]', space=smem, size = 0x4, offset = 0x4, fixed_abs, tag = 'smem constant byte address 0x4 - core index']
  #allocation1 [shape = 'u32[144,128]{1,0:T(1,128)}', space=vmem, size = 0x12000, scoped, tag = 'internal scratch']
  %s0 = inlined_call_operand.vmem [shape: bf16[3,256,256], index: 0, kind: input, shape index: {}]
  %s1 = inlined_call_operand.vmem [shape: bf16[256,128], index: 1, kind: input, shape index: {}]
  %s2 = inlined_call_operand.vmem [shape: f32[3,256,128], index: 2, kind: output, shape index: {}]
  %s3 = sld [smem:[#allocation0]]
  $region41: #{pda_gnn_forward.1} parent=0
    _
  %s5 = ssub.s32 1, %s3
  %s6 = scalar_select 0, %s5, %s3
  loop: start=0, step=1, limit=5
  $region2: #{pda_gnn_forward.1} parent=0 // loop_pre_header
    _
  $region3: #{pda_gnn_forward.1} parent=0 // loop_header
    %s8 = sphi 0, %s12
    %p9 = scmp.ge.s32.totalorder %s8, 5
    %s18 = sphi 0, %s20
    %s21 = sphi 0, %s18
    %s22 = sphi 0, %s21
    %s38 = sphi 0, %s22
    %s42 = sphi 0, %s42
    %s44 = sphi 0, %s42
    %s45 = sphi 0, %s44
    %s59 = sphi 0, %s45
    %s65 = sphi 0, %s67
    %s68 = sphi 0, %s65
    %s69 = sphi 0, %s68
    %s85 = sphi 0, %s69
  $region4: #{pda_gnn_forward.1} parent=0 // loop_header_branch
    %11 = sbr.rel (%p9) target = $region8
  $region5: #{pda_gnn_forward.1} parent=0 // loop_body
    %s13 = ssub.s32 %s8, 1
    %s14 = ssub.s32 %s8, 2
    %s15 = sadd.s32 %s8, 1
    %s16 = ssub.s32 %s8, %s15
    %p17 = scmp.eq.s32.totalorder %s16, 0
    %s19 = sadd.s32 %s18, 1
    %s20 = scalar_select %p17, %s18, %s19
    %p23 = pneg %p17
    %p24 = scmp.eq.s32.totalorder %s8, 2
    %p25 = por %p23, %p24
    %p26 = scmp.ne.s32.totalorder %s18, %s21
    %p27 = scmp.eq.s32.totalorder %s8, 0
    %p28 = por %p26, %p27
    %p29 = scmp.ne.s32.totalorder %s18, %s21
    %p30 = scmp.eq.s32.totalorder %s13, 2
    %p31 = por %p29, %p30
    %p32 = scmp.ne.s32.totalorder %s21, %s22
    %p33 = scmp.eq.s32.totalorder %s13, 0
    %p34 = por %p32, %p33
    %p35 = scmp.ne.s32.totalorder %s21, %s22
    %p36 = scmp.eq.s32.totalorder %s14, 2
    %p37 = por %p35, %p36
    %p39 = scmp.ne.s32.totalorder %s22, %s38
    %p40 = scmp.eq.s32.totalorder %s14, 0
    %p41 = por %p39, %p40
    %s43 = sadd.s32 %s42, 1
    %p46 = scmp.eq.s32.totalorder %s8, 2
    %p47 = scmp.ne.s32.totalorder %s42, %s44
    %p48 = scmp.eq.s32.totalorder %s8, 0
    %p49 = por %p47, %p48
    %p50 = scmp.ne.s32.totalorder %s42, %s44
    %p51 = scmp.eq.s32.totalorder %s13, 2
    %p52 = por %p50, %p51
    %p53 = scmp.ne.s32.totalorder %s44, %s45
    %p54 = scmp.eq.s32.totalorder %s13, 0
    %p55 = por %p53, %p54
    %p56 = scmp.ne.s32.totalorder %s44, %s45
    %p57 = scmp.eq.s32.totalorder %s14, 2
    %p58 = por %p56, %p57
    %p60 = scmp.ne.s32.totalorder %s45, %s59
    %p61 = scmp.eq.s32.totalorder %s14, 0
    %p62 = por %p60, %p61
    %s63 = ssub.s32 %s8, %s15
    %p64 = scmp.eq.s32.totalorder %s63, 0
    %s66 = sadd.s32 %s65, 1
    %s67 = scalar_select %p64, %s65, %s66
    %p70 = pneg %p64
    %p71 = scmp.eq.s32.totalorder %s8, 2
    %p72 = por %p70, %p71
    %p73 = scmp.ne.s32.totalorder %s65, %s68
    %p74 = scmp.eq.s32.totalorder %s8, 0
    %p75 = por %p73, %p74
    %p76 = scmp.ne.s32.totalorder %s65, %s68
    %p77 = scmp.eq.s32.totalorder %s13, 2
    %p78 = por %p76, %p77
    %p79 = scmp.ne.s32.totalorder %s68, %s69
    %p80 = scmp.eq.s32.totalorder %s13, 0
    %p81 = por %p79, %p80
    %p82 = scmp.ne.s32.totalorder %s68, %s69
    %p83 = scmp.eq.s32.totalorder %s14, 2
    %p84 = por %p82, %p83
    %p86 = scmp.ne.s32.totalorder %s69, %s85
    %p87 = scmp.eq.s32.totalorder %s14, 0
    %p88 = por %p86, %p87
    %p89 = scmp.le.s32.totalorder 1, %s8
    %p90 = scmp.lt.s32.totalorder %s8, 4
    %p91 = pnand %p89, %p90
    %p92 = pneg %p91
    // Predicated region
    $region9: #{pda_gnn_forward.1} parent=5 // pred_check
      _
    $region10: #{pda_gnn_forward.1} parent=5 // pred_check_branch
      %94 = sbr.rel (%p91) target = $region12
    $region11: #{pda_gnn_forward.1} parent=5 // pred_region
      %s95 = ssub.s32 %s8, 1
      // Predicated region
      $region13: #{pda_gnn_forward.1} parent=11 // pred_check
        %p96 = pneg %p55
      $region14: #{pda_gnn_forward.1} parent=11 // pred_check_branch
        %98 = sbr.rel (%p96) target = $region16
      $region15: #{pda_gnn_forward.1} parent=11 // pred_region
        _
      $region16: #{pda_gnn_forward.1} parent=11 // pred_fallthru
        _
    $region12: #{pda_gnn_forward.1} parent=5 // pred_fallthru
      _
    %p99 = scmp.lt.s32.totalorder %s8, 3
    // Predicated region
    $region17: #{pda_gnn_forward.1} parent=5 // pred_check
      %p100 = pneg %p99
    $region18: #{pda_gnn_forward.1} parent=5 // pred_check_branch
      %102 = sbr.rel (%p100) target = $region20
    $region19: #{pda_gnn_forward.1} parent=5 // pred_region
      // Predicated region
      $region21: #{pda_gnn_forward.1} parent=19 // pred_check
        %p103 = pneg %p28
      $region22: #{pda_gnn_forward.1} parent=19 // pred_check_branch
        %105 = sbr.rel (%p103) target = $region24
      $region23: #{pda_gnn_forward.1} parent=19 // pred_region
        %p106 = scmp.lt.s32.totalorder %s8, 2
        %s107 = scalar_select %p106, %s8, 2
        %s108 = smul.addr %s107, 64
        %s109 = smul.addr %s108, 4
        %s110 = scalar_lea.vmem %s0, %s109
      $region24: #{pda_gnn_forward.1} parent=19 // pred_fallthru
        _
    $region20: #{pda_gnn_forward.1} parent=5 // pred_fallthru
      _
    %p111 = scmp.le.s32.totalorder 1, %s8
    %p112 = scmp.lt.s32.totalorder %s8, 4
    %p113 = pnand %p111, %p112
    %p114 = pneg %p113
    // Predicated region
    $region25: #{pda_gnn_forward.1} parent=5 // pred_check
      _
    $region26: #{pda_gnn_forward.1} parent=5 // pred_check_branch
      %116 = sbr.rel (%p113) target = $region28
    $region27: #{pda_gnn_forward.1} parent=5 // pred_region
      %s117 = ssub.s32 %s8, 1
      %p118 = scmp.lt.s32.totalorder %s13, 2
      %s119 = scalar_select %p118, %s13, 2
      %s120 = smul.addr %s119, 64
      %s121 = smul.addr %s120, 4
      %s122 = scalar_lea.vmem %s0, %s121
      %p123 = pneg %p34
      %p124 = pneg %p31
      %p125 = pneg %p55
      %p126 = pneg %p52
      %p127 = pneg %p81
      %p128 = pneg %p78
      %p129 = scmp.lt.s32.totalorder %s13, 2
      %s130 = scalar_select %p129, %s13, 2
      %s131 = smul.addr %s130, 32
      %s132 = smul.addr %s131, 8
      %s133 = scalar_lea.vmem %s2, %s132
      %p134 = scmp.lt.s32.totalorder %s13, 2
      %s135 = scalar_select %p134, %s13, 2
      %s136 = smul.addr %s135, 64
      %s137 = smul.addr %s136, 4
      %s138 = scalar_lea.vmem %s0, %s137
      %p139 = scmp.lt.s32.totalorder %s13, 2
      %s140 = scalar_select %p139, %s13, 2
      %s141 = smul.addr %s140, 32
      %s142 = smul.addr %s141, 8
      %s143 = scalar_lea.vmem %s2, %s142
      %v145 = vld [vmem:[%s138] sm:$0xff]
      %v146 = vld [vmem:[%s138 + $0x8] sm:$0xff]
      %v147 = vld [vmem:[%s138 + $0x10] sm:$0xff]
      %v148 = vld [vmem:[%s138 + $0x18] sm:$0xff]
      %v149 = vld [vmem:[%s138 + $0x20] sm:$0xff]
      %v150 = vld [vmem:[%s138 + $0x28] sm:$0xff]
      %v151 = vld [vmem:[%s138 + $0x30] sm:$0xff]
      %v152 = vld [vmem:[%s138 + $0x38] sm:$0xff]
      %v153 = vld [vmem:[%s138 + $0x40] sm:$0xff]
      %v154 = vld [vmem:[%s138 + $0x48] sm:$0xff]
      %v155 = vld [vmem:[%s138 + $0x50] sm:$0xff]
      %v156 = vld [vmem:[%s138 + $0x58] sm:$0xff]
      %v157 = vld [vmem:[%s138 + $0x60] sm:$0xff]
      %v158 = vld [vmem:[%s138 + $0x68] sm:$0xff]
      %v159 = vld [vmem:[%s138 + $0x70] sm:$0xff]
      %v160 = vld [vmem:[%s138 + $0x78] sm:$0xff]
      %v161 = vld [vmem:[%s138 + $0x80] sm:$0xff]
      %v162 = vld [vmem:[%s138 + $0x88] sm:$0xff]
      %v163 = vld [vmem:[%s138 + $0x90] sm:$0xff]
      %v164 = vld [vmem:[%s138 + $0x98] sm:$0xff]
      %v165 = vld [vmem:[%s138 + $0xa0] sm:$0xff]
      %v166 = vld [vmem:[%s138 + $0xa8] sm:$0xff]
      %v167 = vld [vmem:[%s138 + $0xb0] sm:$0xff]
      %v168 = vld [vmem:[%s138 + $0xb8] sm:$0xff]
      %v169 = vld [vmem:[%s138 + $0xc0] sm:$0xff]
      %v170 = vld [vmem:[%s138 + $0xc8] sm:$0xff]
      %v171 = vld [vmem:[%s138 + $0xd0] sm:$0xff]
      %v172 = vld [vmem:[%s138 + $0xd8] sm:$0xff]
      %v173 = vld [vmem:[%s138 + $0xe0] sm:$0xff]
      %v174 = vld [vmem:[%s138 + $0xe8] sm:$0xff]
      %v175 = vld [vmem:[%s138 + $0xf0] sm:$0xff]
      %v176 = vld [vmem:[%s138 + $0xf8] sm:$0xff]
      %v177 = vld [vmem:[%s1] sm:$0xf]
      %v178 = vld [vmem:[%s1 + $0x4] sm:$0xf]
      %v179 = vld [vmem:[%s1 + $0x8] sm:$0xf]
      %v180 = vld [vmem:[%s1 + $0xc] sm:$0xf]
      %v181 = vld [vmem:[%s1 + $0x10] sm:$0xf]
      %v182 = vld [vmem:[%s1 + $0x14] sm:$0xf]
      %v183 = vld [vmem:[%s1 + $0x18] sm:$0xf]
      %v184 = vld [vmem:[%s1 + $0x1c] sm:$0xf]
      %v185 = vld [vmem:[%s1 + $0x20] sm:$0xf]
      %v186 = vld [vmem:[%s1 + $0x24] sm:$0xf]
      %v187 = vld [vmem:[%s1 + $0x28] sm:$0xf]
      %v188 = vld [vmem:[%s1 + $0x2c] sm:$0xf]
      %v189 = vld [vmem:[%s1 + $0x30] sm:$0xf]
      %v190 = vld [vmem:[%s1 + $0x34] sm:$0xf]
      %v191 = vld [vmem:[%s1 + $0x38] sm:$0xf]
      %v192 = vld [vmem:[%s1 + $0x3c] sm:$0xf]
      %v193 = vld [vmem:[%s1 + $0x40] sm:$0xf]
      %v194 = vld [vmem:[%s1 + $0x44] sm:$0xf]
      %v195 = vld [vmem:[%s1 + $0x48] sm:$0xf]
      %v196 = vld [vmem:[%s1 + $0x4c] sm:$0xf]
      %v197 = vld [vmem:[%s1 + $0x50] sm:$0xf]
      %v198 = vld [vmem:[%s1 + $0x54] sm:$0xf]
      %v199 = vld [vmem:[%s1 + $0x58] sm:$0xf]
      %v200 = vld [vmem:[%s1 + $0x5c] sm:$0xf]
      %v201 = vld [vmem:[%s1 + $0x60] sm:$0xf]
      %v202 = vld [vmem:[%s1 + $0x64] sm:$0xf]
      %v203 = vld [vmem:[%s1 + $0x68] sm:$0xf]
      %v204 = vld [vmem:[%s1 + $0x6c] sm:$0xf]
      %v205 = vld [vmem:[%s1 + $0x70] sm:$0xf]
      %v206 = vld [vmem:[%s1 + $0x74] sm:$0xf]
      %v207 = vld [vmem:[%s1 + $0x78] sm:$0xf]
      %v208 = vld [vmem:[%s1 + $0x7c] sm:$0xf]
      %v241 = vunpack.c.l.b16 %v145
      %v242 = vunpack.c.h.b16 %v145
      %v243 = vunpack.c.l.b16 %v146
      %v244 = vunpack.c.h.b16 %v146
      %v245 = vunpack.c.l.b16 %v147
      %v246 = vunpack.c.h.b16 %v147
      %v247 = vunpack.c.l.b16 %v148
      %v248 = vunpack.c.h.b16 %v148
      %v249 = vunpack.c.l.b16 %v149
      %v250 = vunpack.c.h.b16 %v149
      %v251 = vunpack.c.l.b16 %v150
      %v252 = vunpack.c.h.b16 %v150
      %v253 = vunpack.c.l.b16 %v151
      %v254 = vunpack.c.h.b16 %v151
      %v255 = vunpack.c.l.b16 %v152
      %v256 = vunpack.c.h.b16 %v152
      %v257 = vunpack.c.l.b16 %v153
      %v258 = vunpack.c.h.b16 %v153
      %v259 = vunpack.c.l.b16 %v154
      %v260 = vunpack.c.h.b16 %v154
      %v261 = vunpack.c.l.b16 %v155
      %v262 = vunpack.c.h.b16 %v155
      %v263 = vunpack.c.l.b16 %v156
      %v264 = vunpack.c.h.b16 %v156
      %v265 = vunpack.c.l.b16 %v157
      %v266 = vunpack.c.h.b16 %v157
      %v267 = vunpack.c.l.b16 %v158
      %v268 = vunpack.c.h.b16 %v158
      %v269 = vunpack.c.l.b16 %v159
      %v270 = vunpack.c.h.b16 %v159
      %v271 = vunpack.c.l.b16 %v160
      %v272 = vunpack.c.h.b16 %v160
      %v273 = vunpack.c.l.b16 %v161
      %v274 = vunpack.c.h.b16 %v161
      %v275 = vunpack.c.l.b16 %v162
      %v276 = vunpack.c.h.b16 %v162
      %v277 = vunpack.c.l.b16 %v163
      %v278 = vunpack.c.h.b16 %v163
      %v279 = vunpack.c.l.b16 %v164
      %v280 = vunpack.c.h.b16 %v164
      %v281 = vunpack.c.l.b16 %v165
      %v282 = vunpack.c.h.b16 %v165
      %v283 = vunpack.c.l.b16 %v166
      %v284 = vunpack.c.h.b16 %v166
      %v285 = vunpack.c.l.b16 %v167
      %v286 = vunpack.c.h.b16 %v167
      %v287 = vunpack.c.l.b16 %v168
      %v288 = vunpack.c.h.b16 %v168
      %v289 = vunpack.c.l.b16 %v169
      %v290 = vunpack.c.h.b16 %v169
      %v291 = vunpack.c.l.b16 %v170
      %v292 = vunpack.c.h.b16 %v170
      %v293 = vunpack.c.l.b16 %v171
      %v294 = vunpack.c.h.b16 %v171
      %v295 = vunpack.c.l.b16 %v172
      %v296 = vunpack.c.h.b16 %v172
      %v297 = vunpack.c.l.b16 %v173
      %v298 = vunpack.c.h.b16 %v173
      %v299 = vunpack.c.l.b16 %v174
      %v300 = vunpack.c.h.b16 %v174
      %v301 = vunpack.c.l.b16 %v175
      %v302 = vunpack.c.h.b16 %v175
      %v303 = vunpack.c.l.b16 %v176
      %v304 = vunpack.c.h.b16 %v176
      %v305 = vpack.c.b16 %v243, %v241
      %v306 = vpack.c.b16 %v244, %v242
      %v307 = vpack.c.b16 %v247, %v245
      %v308 = vpack.c.b16 %v248, %v246
      %v309 = vpack.c.b16 %v251, %v249
      %v310 = vpack.c.b16 %v252, %v250
      %v311 = vpack.c.b16 %v255, %v253
      %v312 = vpack.c.b16 %v256, %v254
      %v313 = vpack.c.b16 %v259, %v257
      %v314 = vpack.c.b16 %v260, %v258
      %v315 = vpack.c.b16 %v263, %v261
      %v316 = vpack.c.b16 %v264, %v262
      %v317 = vpack.c.b16 %v267, %v265
      %v318 = vpack.c.b16 %v268, %v266
      %v319 = vpack.c.b16 %v271, %v269
      %v320 = vpack.c.b16 %v272, %v270
      %v321 = vpack.c.b16 %v275, %v273
      %v322 = vpack.c.b16 %v276, %v274
      %v323 = vpack.c.b16 %v279, %v277
      %v324 = vpack.c.b16 %v280, %v278
      %v325 = vpack.c.b16 %v283, %v281
      %v326 = vpack.c.b16 %v284, %v282
      %v327 = vpack.c.b16 %v287, %v285
      %v328 = vpack.c.b16 %v288, %v286
      %v329 = vpack.c.b16 %v291, %v289
      %v330 = vpack.c.b16 %v292, %v290
      %v331 = vpack.c.b16 %v295, %v293
      %v332 = vpack.c.b16 %v296, %v294
      %v333 = vpack.c.b16 %v299, %v297
      %v334 = vpack.c.b16 %v300, %v298
      %v335 = vpack.c.b16 %v303, %v301
      %v336 = vpack.c.b16 %v304, %v302
      %v401 = vunpack.c.l.b16 %v177
      %v402 = vunpack.c.l.b16 %v178
      %v403 = vunpack.c.l.b16 %v179
      %v404 = vunpack.c.l.b16 %v180
      %v405 = vunpack.c.l.b16 %v181
      %v406 = vunpack.c.l.b16 %v182
      %v407 = vunpack.c.l.b16 %v183
      %v408 = vunpack.c.l.b16 %v184
      %v409 = vunpack.c.l.b16 %v185
      %v410 = vunpack.c.l.b16 %v186
      %v411 = vunpack.c.l.b16 %v187
      %v412 = vunpack.c.l.b16 %v188
      %v413 = vunpack.c.l.b16 %v189
      %v414 = vunpack.c.l.b16 %v190
      %v415 = vunpack.c.l.b16 %v191
      %v416 = vunpack.c.l.b16 %v192
      %v417 = vunpack.c.l.b16 %v193
      %v418 = vunpack.c.l.b16 %v194
      %v419 = vunpack.c.l.b16 %v195
      %v420 = vunpack.c.l.b16 %v196
      %v421 = vunpack.c.l.b16 %v197
      %v422 = vunpack.c.l.b16 %v198
      %v423 = vunpack.c.l.b16 %v199
      %v424 = vunpack.c.l.b16 %v200
      %v425 = vunpack.c.l.b16 %v201
      %v426 = vunpack.c.l.b16 %v202
      %v427 = vunpack.c.l.b16 %v203
      %v428 = vunpack.c.l.b16 %v204
      %v429 = vunpack.c.l.b16 %v205
      %v430 = vunpack.c.l.b16 %v206
      %v431 = vunpack.c.l.b16 %v207
      %v432 = vunpack.c.l.b16 %v208
      %v433 = vpack.c.b16 %v402, %v401
      %v434 = vpack.c.b16 %v404, %v403
      %v435 = vpack.c.b16 %v406, %v405
      %v436 = vpack.c.b16 %v408, %v407
      %v437 = vpack.c.b16 %v410, %v409
      %v438 = vpack.c.b16 %v412, %v411
      %v439 = vpack.c.b16 %v414, %v413
      %v440 = vpack.c.b16 %v416, %v415
      %v441 = vpack.c.b16 %v418, %v417
      %v442 = vpack.c.b16 %v420, %v419
      %v443 = vpack.c.b16 %v422, %v421
      %v444 = vpack.c.b16 %v424, %v423
      %v445 = vpack.c.b16 %v426, %v425
      %v446 = vpack.c.b16 %v428, %v427
      %v447 = vpack.c.b16 %v430, %v429
      %v448 = vpack.c.b16 %v432, %v431
      %465 = vmatprep.subr.bf16.mxu0 0
      %466 = vmatpush1.bf16.msra.mxu0 %v433
      %467 = vmatprep.subr.bf16.mxu0 0
      %468 = vmatpush1.bf16.msra.mxu0 %v434
      %469 = vmatprep.subr.bf16.mxu0 0
      %470 = vmatpush1.bf16.msra.mxu0 %v435
      %471 = vmatprep.subr.bf16.mxu0 0
      %472 = vmatpush1.bf16.msra.mxu0 %v436
      %473 = vmatprep.subr.bf16.mxu0 0
      %474 = vmatpush1.bf16.msra.mxu0 %v437
      %475 = vmatprep.subr.bf16.mxu0 0
      %476 = vmatpush1.bf16.msra.mxu0 %v438
      %477 = vmatprep.subr.bf16.mxu0 0
      %478 = vmatpush1.bf16.msra.mxu0 %v439
      %479 = vmatprep.subr.bf16.mxu0 0
      %480 = vmatpush1.bf16.msra.mxu0 %v440
      %481 = vmatprep.subr.bf16.mxu0 0
      %482 = vmatpush1.bf16.msra.mxu0 %v441
      %483 = vmatprep.subr.bf16.mxu0 0
      %484 = vmatpush1.bf16.msra.mxu0 %v442
      %485 = vmatprep.subr.bf16.mxu0 0
      %486 = vmatpush1.bf16.msra.mxu0 %v443
      %487 = vmatprep.subr.bf16.mxu0 0
      %488 = vmatpush1.bf16.msra.mxu0 %v444
      %489 = vmatprep.subr.bf16.mxu0 0
      %490 = vmatpush1.bf16.msra.mxu0 %v445
      %491 = vmatprep.subr.bf16.mxu0 0
      %492 = vmatpush1.bf16.msra.mxu0 %v446
      %493 = vmatprep.subr.bf16.mxu0 0
      %494 = vmatpush1.bf16.msra.mxu0 %v447
      %495 = vmatprep.subr.bf16.mxu0 0
      %496 = vmatpush1.bf16.msra.mxu0 %v448
      %497 = vmatprep.mubr.bf16.mxu0 %v306
      %498 = vmatmul.mubr.bf16.gmra.mrb[0].mxu0 %v305
      %v499 = vpop.f32.mrb[0].mxu0
      %v500 = vadd.f32 0.0, %v499
      %v501 = vpop.f32.mrb[0].mxu0
      %v502 = vpop.f32.mrb[0].mxu0
      %v503 = vadd.f32 0.0, %v502
      %v504 = vpop.f32.mrb[0].mxu0
      %505 = vmatprep.mubr.bf16.mxu0 %v308
      %506 = vmatmul.mubr.bf16.gmra.mrb[0].mxu0 %v307
      %v507 = vpop.f32.mrb[0].mxu0
      %v508 = vadd.f32 0.0, %v507
      %v509 = vpop.f32.mrb[0].mxu0
      %v510 = vpop.f32.mrb[0].mxu0
      %v511 = vadd.f32 0.0, %v510
      %v512 = vpop.f32.mrb[0].mxu0
      %513 = vmatprep.mubr.bf16.mxu0 %v310
      %514 = vmatmul.mubr.bf16.gmra.mrb[0].mxu0 %v309
      %v515 = vpop.f32.mrb[0].mxu0
      %v516 = vadd.f32 0.0, %v515
      %v517 = vpop.f32.mrb[0].mxu0
      %v518 = vpop.f32.mrb[0].mxu0
      %v519 = vadd.f32 0.0, %v518
      %v520 = vpop.f32.mrb[0].mxu0
      %521 = vmatprep.mubr.bf16.mxu0 %v312
      %522 = vmatmul.mubr.bf16.gmra.mrb[0].mxu0 %v311
      %v523 = vpop.f32.mrb[0].mxu0
      %v524 = vadd.f32 0.0, %v523
      %v525 = vpop.f32.mrb[0].mxu0
      %v526 = vpop.f32.mrb[0].mxu0
      %v527 = vadd.f32 0.0, %v526
      %v528 = vpop.f32.mrb[0].mxu0
      %529 = vmatprep.mubr.bf16.mxu0 %v314
      %530 = vmatmul.mubr.bf16.gmra.mrb[0].mxu0 %v313
      %v531 = vpop.f32.mrb[0].mxu0
      %v532 = vadd.f32 0.0, %v531
      %v533 = vpop.f32.mrb[0].mxu0
      %v534 = vpop.f32.mrb[0].mxu0
      %v535 = vadd.f32 0.0, %v534
      %v536 = vpop.f32.mrb[0].mxu0
      %537 = vmatprep.mubr.bf16.mxu0 %v316
      %538 = vmatmul.mubr.bf16.gmra.mrb[0].mxu0 %v315
      %v539 = vpop.f32.mrb[0].mxu0
      %v540 = vadd.f32 0.0, %v539
      %v541 = vpop.f32.mrb[0].mxu0
      %v542 = vpop.f32.mrb[0].mxu0
      %v543 = vadd.f32 0.0, %v542
      %v544 = vpop.f32.mrb[0].mxu0
      %545 = vmatprep.mubr.bf16.mxu0 %v318
      %546 = vmatmul.mubr.bf16.gmra.mrb[0].mxu0 %v317
      %v547 = vpop.f32.mrb[0].mxu0
      %v548 = vadd.f32 0.0, %v547
      %v549 = vpop.f32.mrb[0].mxu0
      %v550 = vpop.f32.mrb[0].mxu0
      %v551 = vadd.f32 0.0, %v550
      %v552 = vpop.f32.mrb[0].mxu0
      %553 = vmatprep.mubr.bf16.mxu0 %v320
      %554 = vmatmul.mubr.bf16.gmra.mrb[0].mxu0 %v319
      %v555 = vpop.f32.mrb[0].mxu0
      %v556 = vadd.f32 0.0, %v555
      %v557 = vpop.f32.mrb[0].mxu0
      %v558 = vpop.f32.mrb[0].mxu0
      %v559 = vadd.f32 0.0, %v558
      %v560 = vpop.f32.mrb[0].mxu0
      %561 = vmatprep.mubr.bf16.mxu0 %v322
      %562 = vmatmul.mubr.bf16.gmra.mrb[0].mxu0 %v321
      %v563 = vpop.f32.mrb[0].mxu0
      %v564 = vadd.f32 0.0, %v563
      %v565 = vpop.f32.mrb[0].mxu0
      %v566 = vpop.f32.mrb[0].mxu0
      %v567 = vadd.f32 0.0, %v566
      %v568 = vpop.f32.mrb[0].mxu0
      %569 = vmatprep.mubr.bf16.mxu0 %v324
      %570 = vmatmul.mubr.bf16.gmra.mrb[0].mxu0 %v323
      %v571 = vpop.f32.mrb[0].mxu0
      %v572 = vadd.f32 0.0, %v571
      %v573 = vpop.f32.mrb[0].mxu0
      %v574 = vpop.f32.mrb[0].mxu0
      %v575 = vadd.f32 0.0, %v574
      %v576 = vpop.f32.mrb[0].mxu0
      %577 = vmatprep.mubr.bf16.mxu0 %v326
      %578 = vmatmul.mubr.bf16.gmra.mrb[0].mxu0 %v325
      %v579 = vpop.f32.mrb[0].mxu0
      %v580 = vadd.f32 0.0, %v579
      %v581 = vpop.f32.mrb[0].mxu0
      %v582 = vpop.f32.mrb[0].mxu0
      %v583 = vadd.f32 0.0, %v582
      %v584 = vpop.f32.mrb[0].mxu0
      %585 = vmatprep.mubr.bf16.mxu0 %v328
      %586 = vmatmul.mubr.bf16.gmra.mrb[0].mxu0 %v327
      %v587 = vpop.f32.mrb[0].mxu0
      %v588 = vadd.f32 0.0, %v587
      %v589 = vpop.f32.mrb[0].mxu0
      %v590 = vpop.f32.mrb[0].mxu0
      %v591 = vadd.f32 0.0, %v590
      %v592 = vpop.f32.mrb[0].mxu0
      %593 = vmatprep.mubr.bf16.mxu0 %v330
      %594 = vmatmul.mubr.bf16.gmra.mrb[0].mxu0 %v329
      %v595 = vpop.f32.mrb[0].mxu0
      %v596 = vadd.f32 0.0, %v595
      %v597 = vpop.f32.mrb[0].mxu0
      %v598 = vpop.f32.mrb[0].mxu0
      %v599 = vadd.f32 0.0, %v598
      %v600 = vpop.f32.mrb[0].mxu0
      %601 = vmatprep.mubr.bf16.mxu0 %v332
      %602 = vmatmul.mubr.bf16.gmra.mrb[0].mxu0 %v331
      %v603 = vpop.f32.mrb[0].mxu0
      %v604 = vadd.f32 0.0, %v603
      %v605 = vpop.f32.mrb[0].mxu0
      %v606 = vpop.f32.mrb[0].mxu0
      %v607 = vadd.f32 0.0, %v606
      %v608 = vpop.f32.mrb[0].mxu0
      %609 = vmatprep.mubr.bf16.mxu0 %v334
      %610 = vmatmul.mubr.bf16.gmra.mrb[0].mxu0 %v333
      %v611 = vpop.f32.mrb[0].mxu0
      %v612 = vadd.f32 0.0, %v611
      %v613 = vpop.f32.mrb[0].mxu0
      %v614 = vpop.f32.mrb[0].mxu0
      %v615 = vadd.f32 0.0, %v614
      %v616 = vpop.f32.mrb[0].mxu0
      %617 = vmatprep.mubr.bf16.mxu0 %v336
      %618 = vmatmul.mubr.bf16.gmra.mrb[0].mxu0 %v335
      %v619 = vpop.f32.mrb[0].mxu0
      %v620 = vadd.f32 0.0, %v619
      %v621 = vpop.f32.mrb[0].mxu0
      %v622 = vpop.f32.mrb[0].mxu0
      %v623 = vadd.f32 0.0, %v622
      %v624 = vpop.f32.mrb[0].mxu0
      %625 = vdwg.mxu0
      %v626 = vpack.c.bf16 %v503, %v500
      %v627 = vpack.c.bf16 %v511, %v508
      %v628 = vpack.c.bf16 %v519, %v516
      %v629 = vpack.c.bf16 %v527, %v524
      %v630 = vpack.c.bf16 %v535, %v532
      %v631 = vpack.c.bf16 %v543, %v540
      %v632 = vpack.c.bf16 %v551, %v548
      %v633 = vpack.c.bf16 %v559, %v556
      %v634 = vpack.c.bf16 %v567, %v564
      %v635 = vpack.c.bf16 %v575, %v572
      %v636 = vpack.c.bf16 %v583, %v580
      %v637 = vpack.c.bf16 %v591, %v588
      %v638 = vpack.c.bf16 %v599, %v596
      %v639 = vpack.c.bf16 %v607, %v604
      %v640 = vpack.c.bf16 %v615, %v612
      %v641 = vpack.c.bf16 %v623, %v620
      %642 = vmatprep.subr.bf16.mxu0 0
      %643 = vmatpush1.bf16.msra.mxu0 %v626
      %644 = vmatprep.subr.bf16.mxu0 0
      %645 = vmatpush1.bf16.msra.mxu0 %v627
      %646 = vmatprep.subr.bf16.mxu0 0
      %647 = vmatpush1.bf16.msra.mxu0 %v628
      %648 = vmatprep.subr.bf16.mxu0 0
      %649 = vmatpush1.bf16.msra.mxu0 %v629
      %650 = vmatprep.subr.bf16.mxu0 0
      %651 = vmatpush1.bf16.msra.mxu0 %v630
      %652 = vmatprep.subr.bf16.mxu0 0
      %653 = vmatpush1.bf16.msra.mxu0 %v631
      %654 = vmatprep.subr.bf16.mxu0 0
      %655 = vmatpush1.bf16.msra.mxu0 %v632
      %656 = vmatprep.subr.bf16.mxu0 0
      %657 = vmatpush1.bf16.msra.mxu0 %v633
      %658 = vmatprep.subr.bf16.mxu0 0
      %659 = vmatpush1.bf16.msra.mxu0 %v634
      %660 = vmatprep.subr.bf16.mxu0 0
      %661 = vmatpush1.bf16.msra.mxu0 %v635
      %662 = vmatprep.subr.bf16.mxu0 0
      %663 = vmatpush1.bf16.msra.mxu0 %v636
      %664 = vmatprep.subr.bf16.mxu0 0
      %665 = vmatpush1.bf16.msra.mxu0 %v637
      %666 = vmatprep.subr.bf16.mxu0 0
      %667 = vmatpush1.bf16.msra.mxu0 %v638
      %668 = vmatprep.subr.bf16.mxu0 0
      %669 = vmatpush1.bf16.msra.mxu0 %v639
      %670 = vmatprep.subr.bf16.mxu0 0
      %671 = vmatpush1.bf16.msra.mxu0 %v640
      %672 = vmatprep.subr.bf16.mxu0 0
      %673 = vmatpush1.bf16.msra.mxu0 %v641
      %674 = vmatprep.mubr.bf16.mxu0 %v306
      %675 = vmatmul.mubr.bf16.gmra.mrb[0].mxu0 %v305
      %v676 = vpop.f32.mrb[0].mxu0
      %v677 = vadd.f32 0.0, %v676
      %v678 = vpop.f32.mrb[0].mxu0
      %v679 = vpop.f32.mrb[0].mxu0
      %v680 = vadd.f32 0.0, %v679
      %v681 = vpop.f32.mrb[0].mxu0
      %682 = vmatprep.mubr.bf16.mxu0 %v308
      %683 = vmatmul.mubr.bf16.gmra.mrb[0].mxu0 %v307
      %v684 = vpop.f32.mrb[0].mxu0
      %v685 = vadd.f32 0.0, %v684
      %v686 = vpop.f32.mrb[0].mxu0
      %v687 = vpop.f32.mrb[0].mxu0
      %v688 = vadd.f32 0.0, %v687
      %v689 = vpop.f32.mrb[0].mxu0
      %690 = vmatprep.mubr.bf16.mxu0 %v310
      %691 = vmatmul.mubr.bf16.gmra.mrb[0].mxu0 %v309
      %v692 = vpop.f32.mrb[0].mxu0
      %v693 = vadd.f32 0.0, %v692
      %v694 = vpop.f32.mrb[0].mxu0
      %v695 = vpop.f32.mrb[0].mxu0
      %v696 = vadd.f32 0.0, %v695
      %v697 = vpop.f32.mrb[0].mxu0
      %698 = vmatprep.mubr.bf16.mxu0 %v312
      %699 = vmatmul.mubr.bf16.gmra.mrb[0].mxu0 %v311
      %v700 = vpop.f32.mrb[0].mxu0
      %v701 = vadd.f32 0.0, %v700
      %v702 = vpop.f32.mrb[0].mxu0
      %v703 = vpop.f32.mrb[0].mxu0
      %v704 = vadd.f32 0.0, %v703
      %v705 = vpop.f32.mrb[0].mxu0
      %706 = vmatprep.mubr.bf16.mxu0 %v314
      %707 = vmatmul.mubr.bf16.gmra.mrb[0].mxu0 %v313
      %v708 = vpop.f32.mrb[0].mxu0
      %v709 = vadd.f32 0.0, %v708
      %v710 = vpop.f32.mrb[0].mxu0
      %v711 = vpop.f32.mrb[0].mxu0
      %v712 = vadd.f32 0.0, %v711
      %v713 = vpop.f32.mrb[0].mxu0
      %714 = vmatprep.mubr.bf16.mxu0 %v316
      %715 = vmatmul.mubr.bf16.gmra.mrb[0].mxu0 %v315
      %v716 = vpop.f32.mrb[0].mxu0
      %v717 = vadd.f32 0.0, %v716
      %v718 = vpop.f32.mrb[0].mxu0
      %v719 = vpop.f32.mrb[0].mxu0
      %v720 = vadd.f32 0.0, %v719
      %v721 = vpop.f32.mrb[0].mxu0
      %722 = vmatprep.mubr.bf16.mxu0 %v318
      %723 = vmatmul.mubr.bf16.gmra.mrb[0].mxu0 %v317
      %v724 = vpop.f32.mrb[0].mxu0
      %v725 = vadd.f32 0.0, %v724
      %v726 = vpop.f32.mrb[0].mxu0
      %v727 = vpop.f32.mrb[0].mxu0
      %v728 = vadd.f32 0.0, %v727
      %v729 = vpop.f32.mrb[0].mxu0
      %730 = vmatprep.mubr.bf16.mxu0 %v320
      %731 = vmatmul.mubr.bf16.gmra.mrb[0].mxu0 %v319
      %v732 = vpop.f32.mrb[0].mxu0
      %v733 = vadd.f32 0.0, %v732
      %v734 = vpop.f32.mrb[0].mxu0
      %v735 = vpop.f32.mrb[0].mxu0
      %v736 = vadd.f32 0.0, %v735
      %v737 = vpop.f32.mrb[0].mxu0
      %738 = vmatprep.mubr.bf16.mxu0 %v322
      %739 = vmatmul.mubr.bf16.gmra.mrb[0].mxu0 %v321
      %v740 = vpop.f32.mrb[0].mxu0
      %v741 = vadd.f32 0.0, %v740
      %v742 = vpop.f32.mrb[0].mxu0
      %v743 = vpop.f32.mrb[0].mxu0
      %v744 = vadd.f32 0.0, %v743
      %v745 = vpop.f32.mrb[0].mxu0
      %746 = vmatprep.mubr.bf16.mxu0 %v324
      %747 = vmatmul.mubr.bf16.gmra.mrb[0].mxu0 %v323
      %v748 = vpop.f32.mrb[0].mxu0
      %v749 = vadd.f32 0.0, %v748
      %v750 = vpop.f32.mrb[0].mxu0
      %v751 = vpop.f32.mrb[0].mxu0
      %v752 = vadd.f32 0.0, %v751
      %v753 = vpop.f32.mrb[0].mxu0
      %754 = vmatprep.mubr.bf16.mxu0 %v326
      %755 = vmatmul.mubr.bf16.gmra.mrb[0].mxu0 %v325
      %v756 = vpop.f32.mrb[0].mxu0
      %v757 = vadd.f32 0.0, %v756
      %v758 = vpop.f32.mrb[0].mxu0
      %v759 = vpop.f32.mrb[0].mxu0
      %v760 = vadd.f32 0.0, %v759
      %v761 = vpop.f32.mrb[0].mxu0
      %762 = vmatprep.mubr.bf16.mxu0 %v328
      %763 = vmatmul.mubr.bf16.gmra.mrb[0].mxu0 %v327
      %v764 = vpop.f32.mrb[0].mxu0
      %v765 = vadd.f32 0.0, %v764
      %v766 = vpop.f32.mrb[0].mxu0
      %v767 = vpop.f32.mrb[0].mxu0
      %v768 = vadd.f32 0.0, %v767
      %v769 = vpop.f32.mrb[0].mxu0
      %770 = vmatprep.mubr.bf16.mxu0 %v330
      %771 = vmatmul.mubr.bf16.gmra.mrb[0].mxu0 %v329
      %v772 = vpop.f32.mrb[0].mxu0
      %v773 = vadd.f32 0.0, %v772
      %v774 = vpop.f32.mrb[0].mxu0
      %v775 = vpop.f32.mrb[0].mxu0
      %v776 = vadd.f32 0.0, %v775
      %v777 = vpop.f32.mrb[0].mxu0
      %778 = vmatprep.mubr.bf16.mxu0 %v332
      %779 = vmatmul.mubr.bf16.gmra.mrb[0].mxu0 %v331
      %v780 = vpop.f32.mrb[0].mxu0
      %v781 = vadd.f32 0.0, %v780
      %v782 = vpop.f32.mrb[0].mxu0
      %v783 = vpop.f32.mrb[0].mxu0
      %v784 = vadd.f32 0.0, %v783
      %v785 = vpop.f32.mrb[0].mxu0
      %786 = vmatprep.mubr.bf16.mxu0 %v334
      %787 = vmatmul.mubr.bf16.gmra.mrb[0].mxu0 %v333
      %v788 = vpop.f32.mrb[0].mxu0
      %v789 = vadd.f32 0.0, %v788
      %v790 = vpop.f32.mrb[0].mxu0
      %v791 = vpop.f32.mrb[0].mxu0
      %v792 = vadd.f32 0.0, %v791
      %v793 = vpop.f32.mrb[0].mxu0
      %794 = vmatprep.mubr.bf16.mxu0 %v336
      %795 = vmatmul.mubr.bf16.gmra.mrb[0].mxu0 %v335
      %v796 = vpop.f32.mrb[0].mxu0
      %v797 = vadd.f32 0.0, %v796
      %v798 = vpop.f32.mrb[0].mxu0
      %v799 = vpop.f32.mrb[0].mxu0
      %v800 = vadd.f32 0.0, %v799
      %v801 = vpop.f32.mrb[0].mxu0
      %802 = vdwg.mxu0
      %v803 = vmul.f32 %v677, %v677
      %v804 = vmul.f32 %v680, %v680
      %v805 = vmul.f32 %v685, %v685
      %v806 = vmul.f32 %v688, %v688
      %v807 = vmul.f32 %v693, %v693
      %v808 = vmul.f32 %v696, %v696
      %v809 = vmul.f32 %v701, %v701
      %v810 = vmul.f32 %v704, %v704
      %v811 = vmul.f32 %v709, %v709
      %v812 = vmul.f32 %v712, %v712
      %v813 = vmul.f32 %v717, %v717
      %v814 = vmul.f32 %v720, %v720
      %v815 = vmul.f32 %v725, %v725
      %v816 = vmul.f32 %v728, %v728
      %v817 = vmul.f32 %v733, %v733
      %v818 = vmul.f32 %v736, %v736
      %v819 = vmul.f32 %v741, %v741
      %v820 = vmul.f32 %v744, %v744
      %v821 = vmul.f32 %v749, %v749
      %v822 = vmul.f32 %v752, %v752
      %v823 = vmul.f32 %v757, %v757
      %v824 = vmul.f32 %v760, %v760
      %v825 = vmul.f32 %v765, %v765
      %v826 = vmul.f32 %v768, %v768
      %v827 = vmul.f32 %v773, %v773
      %v828 = vmul.f32 %v776, %v776
      %v829 = vmul.f32 %v781, %v781
      %v830 = vmul.f32 %v784, %v784
      %v831 = vmul.f32 %v789, %v789
      %v832 = vmul.f32 %v792, %v792
      %v833 = vmul.f32 %v797, %v797
      %v834 = vmul.f32 %v800, %v800
      %835 = vadd.xlane.f32.xlu0 %v803
      %v836 = vpop.xlane.xlu0 %835
      %837 = vadd.xlane.f32.xlu0 %v804
      %v838 = vpop.xlane.xlu0 %837
      %839 = vadd.xlane.f32.xlu0 %v805
      %v840 = vpop.xlane.xlu0 %839
      %841 = vadd.xlane.f32.xlu0 %v806
      %v842 = vpop.xlane.xlu0 %841
      %843 = vadd.xlane.f32.xlu0 %v807
      %v844 = vpop.xlane.xlu0 %843
      %845 = vadd.xlane.f32.xlu0 %v808
      %v846 = vpop.xlane.xlu0 %845
      %847 = vadd.xlane.f32.xlu0 %v809
      %v848 = vpop.xlane.xlu0 %847
      %849 = vadd.xlane.f32.xlu0 %v810
      %v850 = vpop.xlane.xlu0 %849
      %851 = vadd.xlane.f32.xlu0 %v811
      %v852 = vpop.xlane.xlu0 %851
      %853 = vadd.xlane.f32.xlu0 %v812
      %v854 = vpop.xlane.xlu0 %853
      %855 = vadd.xlane.f32.xlu0 %v813
      %v856 = vpop.xlane.xlu0 %855
      %857 = vadd.xlane.f32.xlu0 %v814
      %v858 = vpop.xlane.xlu0 %857
      %859 = vadd.xlane.f32.xlu0 %v815
      %v860 = vpop.xlane.xlu0 %859
      %861 = vadd.xlane.f32.xlu0 %v816
      %v862 = vpop.xlane.xlu0 %861
      %863 = vadd.xlane.f32.xlu0 %v817
      %v864 = vpop.xlane.xlu0 %863
      %865 = vadd.xlane.f32.xlu0 %v818
      %v866 = vpop.xlane.xlu0 %865
      %867 = vadd.xlane.f32.xlu0 %v819
      %v868 = vpop.xlane.xlu0 %867
      %869 = vadd.xlane.f32.xlu0 %v820
      %v870 = vpop.xlane.xlu0 %869
      %871 = vadd.xlane.f32.xlu0 %v821
      %v872 = vpop.xlane.xlu0 %871
      %873 = vadd.xlane.f32.xlu0 %v822
      %v874 = vpop.xlane.xlu0 %873
      %875 = vadd.xlane.f32.xlu0 %v823
      %v876 = vpop.xlane.xlu0 %875
      %877 = vadd.xlane.f32.xlu0 %v824
      %v878 = vpop.xlane.xlu0 %877
      %879 = vadd.xlane.f32.xlu0 %v825
      %v880 = vpop.xlane.xlu0 %879
      %881 = vadd.xlane.f32.xlu0 %v826
      %v882 = vpop.xlane.xlu0 %881
      %883 = vadd.xlane.f32.xlu0 %v827
      %v884 = vpop.xlane.xlu0 %883
      %885 = vadd.xlane.f32.xlu0 %v828
      %v886 = vpop.xlane.xlu0 %885
      %887 = vadd.xlane.f32.xlu0 %v829
      %v888 = vpop.xlane.xlu0 %887
      %889 = vadd.xlane.f32.xlu0 %v830
      %v890 = vpop.xlane.xlu0 %889
      %891 = vadd.xlane.f32.xlu0 %v831
      %v892 = vpop.xlane.xlu0 %891
      %893 = vadd.xlane.f32.xlu0 %v832
      %v894 = vpop.xlane.xlu0 %893
      %895 = vadd.xlane.f32.xlu0 %v833
      %v896 = vpop.xlane.xlu0 %895
      %897 = vadd.xlane.f32.xlu0 %v834
      %v898 = vpop.xlane.xlu0 %897
      %v899 = vmax.f32 %v836, 1e-24
      %v900 = vmax.f32 %v838, 1e-24
      %v901 = vmax.f32 %v840, 1e-24
      %v902 = vmax.f32 %v842, 1e-24
      %v903 = vmax.f32 %v844, 1e-24
      %v904 = vmax.f32 %v846, 1e-24
      %v905 = vmax.f32 %v848, 1e-24
      %v906 = vmax.f32 %v850, 1e-24
      %v907 = vmax.f32 %v852, 1e-24
      %v908 = vmax.f32 %v854, 1e-24
      %v909 = vmax.f32 %v856, 1e-24
      %v910 = vmax.f32 %v858, 1e-24
      %v911 = vmax.f32 %v860, 1e-24
      %v912 = vmax.f32 %v862, 1e-24
      %v913 = vmax.f32 %v864, 1e-24
      %v914 = vmax.f32 %v866, 1e-24
      %v915 = vmax.f32 %v868, 1e-24
      %v916 = vmax.f32 %v870, 1e-24
      %v917 = vmax.f32 %v872, 1e-24
      %v918 = vmax.f32 %v874, 1e-24
      %v919 = vmax.f32 %v876, 1e-24
      %v920 = vmax.f32 %v878, 1e-24
      %v921 = vmax.f32 %v880, 1e-24
      %v922 = vmax.f32 %v882, 1e-24
      %v923 = vmax.f32 %v884, 1e-24
      %v924 = vmax.f32 %v886, 1e-24
      %v925 = vmax.f32 %v888, 1e-24
      %v926 = vmax.f32 %v890, 1e-24
      %v927 = vmax.f32 %v892, 1e-24
      %v928 = vmax.f32 %v894, 1e-24
      %v929 = vmax.f32 %v896, 1e-24
      %v930 = vmax.f32 %v898, 1e-24
      %v931 = vrsqrt.pop %v899
      %v932 = vrsqrt.pop %v900
      %v933 = vrsqrt.pop %v901
      %v934 = vrsqrt.pop %v902
      %v935 = vrsqrt.pop %v903
      %v936 = vrsqrt.pop %v904
      %v937 = vrsqrt.pop %v905
      %v938 = vrsqrt.pop %v906
      %v939 = vrsqrt.pop %v907
      %v940 = vrsqrt.pop %v908
      %v941 = vrsqrt.pop %v909
      %v942 = vrsqrt.pop %v910
      %v943 = vrsqrt.pop %v911
      %v944 = vrsqrt.pop %v912
      %v945 = vrsqrt.pop %v913
      %v946 = vrsqrt.pop %v914
      %v947 = vrsqrt.pop %v915
      %v948 = vrsqrt.pop %v916
      %v949 = vrsqrt.pop %v917
      %v950 = vrsqrt.pop %v918
      %v951 = vrsqrt.pop %v919
      %v952 = vrsqrt.pop %v920
      %v953 = vrsqrt.pop %v921
      %v954 = vrsqrt.pop %v922
      %v955 = vrsqrt.pop %v923
      %v956 = vrsqrt.pop %v924
      %v957 = vrsqrt.pop %v925
      %v958 = vrsqrt.pop %v926
      %v959 = vrsqrt.pop %v927
      %v960 = vrsqrt.pop %v928
      %v961 = vrsqrt.pop %v929
      %v962 = vrsqrt.pop %v930
      %v963 = vmul.f32 %v677, %v931
      %v964 = vmul.f32 %v680, %v932
      %v965 = vmul.f32 %v685, %v933
      %v966 = vmul.f32 %v688, %v934
      %v967 = vmul.f32 %v693, %v935
      %v968 = vmul.f32 %v696, %v936
      %v969 = vmul.f32 %v701, %v937
      %v970 = vmul.f32 %v704, %v938
      %v971 = vmul.f32 %v709, %v939
      %v972 = vmul.f32 %v712, %v940
      %v973 = vmul.f32 %v717, %v941
      %v974 = vmul.f32 %v720, %v942
      %v975 = vmul.f32 %v725, %v943
      %v976 = vmul.f32 %v728, %v944
      %v977 = vmul.f32 %v733, %v945
      %v978 = vmul.f32 %v736, %v946
      %v979 = vmul.f32 %v741, %v947
      %v980 = vmul.f32 %v744, %v948
      %v981 = vmul.f32 %v749, %v949
      %v982 = vmul.f32 %v752, %v950
      %v983 = vmul.f32 %v757, %v951
      %v984 = vmul.f32 %v760, %v952
      %v985 = vmul.f32 %v765, %v953
      %v986 = vmul.f32 %v768, %v954
      %v987 = vmul.f32 %v773, %v955
      %v988 = vmul.f32 %v776, %v956
      %v989 = vmul.f32 %v781, %v957
      %v990 = vmul.f32 %v784, %v958
      %v991 = vmul.f32 %v789, %v959
      %v992 = vmul.f32 %v792, %v960
      %v993 = vmul.f32 %v797, %v961
      %v994 = vmul.f32 %v800, %v962
      %995 = vst [vmem:[%s143] sm:$0xff] %v963
      %996 = vst [vmem:[%s143 + $0x8] sm:$0xff] %v964
      %997 = vst [vmem:[%s143 + $0x10] sm:$0xff] %v965
      %998 = vst [vmem:[%s143 + $0x18] sm:$0xff] %v966
      %999 = vst [vmem:[%s143 + $0x20] sm:$0xff] %v967
      %1000 = vst [vmem:[%s143 + $0x28] sm:$0xff] %v968
      %1001 = vst [vmem:[%s143 + $0x30] sm:$0xff] %v969
      %1002 = vst [vmem:[%s143 + $0x38] sm:$0xff] %v970
      %1003 = vst [vmem:[%s143 + $0x40] sm:$0xff] %v971
      %1004 = vst [vmem:[%s143 + $0x48] sm:$0xff] %v972
      %1005 = vst [vmem:[%s143 + $0x50] sm:$0xff] %v973
      %1006 = vst [vmem:[%s143 + $0x58] sm:$0xff] %v974
      %1007 = vst [vmem:[%s143 + $0x60] sm:$0xff] %v975
      %1008 = vst [vmem:[%s143 + $0x68] sm:$0xff] %v976
      %1009 = vst [vmem:[%s143 + $0x70] sm:$0xff] %v977
      %1010 = vst [vmem:[%s143 + $0x78] sm:$0xff] %v978
      %1011 = vst [vmem:[%s143 + $0x80] sm:$0xff] %v979
      %1012 = vst [vmem:[%s143 + $0x88] sm:$0xff] %v980
      %1013 = vst [vmem:[%s143 + $0x90] sm:$0xff] %v981
      %1014 = vst [vmem:[%s143 + $0x98] sm:$0xff] %v982
      %1015 = vst [vmem:[%s143 + $0xa0] sm:$0xff] %v983
      %1016 = vst [vmem:[%s143 + $0xa8] sm:$0xff] %v984
      %1017 = vst [vmem:[%s143 + $0xb0] sm:$0xff] %v985
      %1018 = vst [vmem:[%s143 + $0xb8] sm:$0xff] %v986
      %1019 = vst [vmem:[%s143 + $0xc0] sm:$0xff] %v987
      %1020 = vst [vmem:[%s143 + $0xc8] sm:$0xff] %v988
      %1021 = vst [vmem:[%s143 + $0xd0] sm:$0xff] %v989
      %1022 = vst [vmem:[%s143 + $0xd8] sm:$0xff] %v990
      %1023 = vst [vmem:[%s143 + $0xe0] sm:$0xff] %v991
      %1024 = vst [vmem:[%s143 + $0xe8] sm:$0xff] %v992
      %1025 = vst [vmem:[%s143 + $0xf0] sm:$0xff] %v993
      %1026 = vst [vmem:[%s143 + $0xf8] sm:$0xff] %v994
      %p1027 = scmp.lt.s32.totalorder %s13, 2
      %s1028 = scalar_select %p1027, %s13, 2
      %s1029 = smul.addr %s1028, 32
      %s1030 = smul.addr %s1029, 8
      %s1031 = scalar_lea.vmem %s2, %s1030
      // Predicated region
      $region29: #{pda_gnn_forward.1} parent=27 // pred_check
        %p1032 = pneg %p78
      $region30: #{pda_gnn_forward.1} parent=27 // pred_check_branch
        %1034 = sbr.rel (%p1032) target = $region32
      $region31: #{pda_gnn_forward.1} parent=27 // pred_region
        _
      $region32: #{pda_gnn_forward.1} parent=27 // pred_fallthru
        _
    $region28: #{pda_gnn_forward.1} parent=5 // pred_fallthru
      _
    %p1035 = scmp.le.s32.totalorder 2, %s8
    // Predicated region
    $region33: #{pda_gnn_forward.1} parent=5 // pred_check
      %p1036 = pneg %p1035
    $region34: #{pda_gnn_forward.1} parent=5 // pred_check_branch
      %1038 = sbr.rel (%p1036) target = $region36
    $region35: #{pda_gnn_forward.1} parent=5 // pred_region
      %s1039 = ssub.s32 %s8, 2
      // Predicated region
      $region37: #{pda_gnn_forward.1} parent=35 // pred_check
        %p1040 = pneg %p84
      $region38: #{pda_gnn_forward.1} parent=35 // pred_check_branch
        %1042 = sbr.rel (%p1040) target = $region40
      $region39: #{pda_gnn_forward.1} parent=35 // pred_region
        %p1043 = scmp.lt.s32.totalorder %s14, 2
        %s1044 = scalar_select %p1043, %s14, 2
        %s1045 = smul.addr %s1044, 32
        %s1046 = smul.addr %s1045, 8
        %s1047 = scalar_lea.vmem %s2, %s1046
      $region40: #{pda_gnn_forward.1} parent=35 // pred_fallthru
        _
    $region36: #{pda_gnn_forward.1} parent=5 // pred_fallthru
      _
  $region6: #{pda_gnn_forward.1} parent=0 // loop_footer
    %s12 = sadd.s32 1, %s8
  $region7: #{pda_gnn_forward.1} parent=0 // loop_footer_branch
    %7 = sbr.rel target = $region3
  $region8: #{pda_gnn_forward.1} parent=0 // loop_exit
    _

</llo_original>
